<compile_context>
chip_gen: v6e
topology: v6e:2x2x1
jax: 0.10.0
libtpu: 0.0.40
codegen_flags: <defaults>
</compile_context>

<pallas_src>
import jax
import jax.numpy as jnp
from jax import lax
from jax.experimental import pallas as pl
from jax.experimental.pallas import tpu as pltpu

IN_FEATURES = 50
_LANES = 128          # output lane width (vreg lane count)
_TB_MAX = 8192        # rows per grid step (VMEM-budgeted for all generations)


def _round_up(x: int, m: int) -> int:
    return ((x + m - 1) // m) * m


def _hdl_kernel(x_ref, w_ref, b_ref, o_ref):
    # x_ref: [tb, D] VMEM tile, w_ref: [1, D] VMEM (resident),
    # b_ref: [1] SMEM scalar, o_ref: [tb // 128, 128] VMEM (lane-dense rows).
    x = x_ref[...].astype(jnp.float32)                     # [tb, D]
    w = w_ref[...].astype(jnp.float32)                     # [1, D]
    # MXU matvec with the batch axis landing on lanes: [1, D] . [tb, D]^T -> [1, tb]
    acc = lax.dot_general(
        w, x,
        dimension_numbers=(((1,), (1,)), ((), ())),
        preferred_element_type=jnp.float32,
        precision=lax.Precision.HIGHEST,
    )
    acc = acc + b_ref[0]                                    # scalar bias from SMEM
    # Lane-dense store: [1, tb] -> [tb/128, 128] (row-major order preserved).
    o_ref[...] = acc.reshape(o_ref.shape).astype(o_ref.dtype)


def hdl_forward(feature, weight, bias):
    """Pallas implementation of HDL.forward.

    feature: [..., 50]
    weight:  [1, 50]   (PyTorch nn.Linear layout: [out_features, in_features])
    bias:    [1]
    returns: array of shape feature.shape[:-1]
    """
    *lead, d = feature.shape
    assert d == IN_FEATURES, f"expected last dim {IN_FEATURES}, got {d}"
    assert weight.shape == (1, d), f"bad weight shape {weight.shape}"
    assert bias.shape == (1,), f"bad bias shape {bias.shape}"

    x = feature.reshape(-1, d)                 # flatten leading dims -> [B, 50]
    n_rows = x.shape[0]

    # Rows per grid step: a multiple of 128 (so each output block is lane-dense),
    # capped at _TB_MAX to stay inside every generation's scoped-VMEM default.
    tb = min(_TB_MAX, _round_up(n_rows, _LANES))
    grid = (pl.cdiv(n_rows, tb),)              # ragged tail is masked by Pallas
    r_out = pl.cdiv(n_rows, _LANES)            # total 128-wide output rows
    tr = tb // _LANES                          # output rows per grid step

    itemsize = jnp.dtype(feature.dtype).itemsize
    cost = pl.CostEstimate(
        flops=2 * n_rows * d,
        transcendentals=0,
        bytes_accessed=n_rows * d * itemsize          # activation read
        + r_out * _LANES * itemsize                   # output write
        + (d + 1) * 4,                                # weight + bias
    )

    out = pl.pallas_call(
        _hdl_kernel,
        out_shape=jax.ShapeDtypeStruct((r_out, _LANES), feature.dtype),
        grid_spec=pltpu.PrefetchScalarGridSpec(
            num_scalar_prefetch=0,
            grid=grid,
            in_specs=[
                pl.BlockSpec((tb, d), lambda i: (i, 0)),             # activation tile
                pl.BlockSpec((1, d), lambda i: (0, 0)),              # weight row (resident)
                pl.BlockSpec(memory_space=pltpu.MemorySpace.SMEM),   # bias scalar
            ],
            out_specs=pl.BlockSpec((tr, _LANES), lambda i: (i, 0)),  # lane-dense output
        ),
        compiler_params=pltpu.CompilerParams(
            dimension_semantics=("parallel",),   # batch grid -> megacore/TC sharding
        ),
        cost_estimate=cost,
    )(x, weight, bias.astype(jnp.float32))

    # Drop tail padding (only when n_rows % 128 != 0) and restore leading dims.
    flat = out.reshape(-1)
    if flat.shape[0] != n_rows:
        flat = flat[:n_rows]
    return flat.reshape(tuple(lead))


if __name__ == "__main__":
    # Small deterministic example consistent with the module: feature [..., 50].
    B, S, D = 2, 8, IN_FEATURES

    key = jax.random.PRNGKey(0)
    kf, kw, kb = jax.random.split(key, 3)
    feature = jax.random.normal(kf, (B, S, D), dtype=jnp.float32)
    # nn.Linear(50, 1) parameters (deterministic stand-in for PyTorch's init).
    weight = jax.random.uniform(kw, (1, D), dtype=jnp.float32, minval=-0.1, maxval=0.1)
    bias = jax.random.uniform(kb, (1,), dtype=jnp.float32, minval=-0.1, maxval=0.1)

    out = hdl_forward(feature, weight, bias)
    jax.block_until_ready(out)
    assert out.shape == (B, S), f"bad output shape {out.shape}"

    # Pure-JAX reference: Linear(50, 1) followed by squeeze(-1).
    ref = (feature @ weight.T + bias)[..., 0]
    assert jnp.allclose(out, ref, atol=1e-4, rtol=1e-4), "output mismatch vs reference"

    print("KERNEL_OK")
</pallas_src>

<mosaic_0001>
module attributes {stable_mosaic.version = 11 : i64} {
  func.func @_hdl_kernel(%arg0: i32, %arg1: memref<128x50xf32, #tpu.memory_space<vmem>>, %arg2: memref<1x50xf32, #tpu.memory_space<vmem>>, %arg3: memref<1xf32, #tpu.memory_space<smem>>, %arg4: memref<1x128xf32, #tpu.memory_space<vmem>>) attributes {dimension_semantics = [#tpu.dimension_semantics<parallel>], iteration_bounds = array<i64: 1>, scalar_prefetch = 0 : i64, scratch_operands = 0 : i64, tpu.core_type = #tpu.core_type<tc>, window_params = [{transform_indices = @transform_0, window_bounds = array<i64: 128, 50>}, {pipeline_mode = #tpu.pipeline_mode<synchronous>, transform_indices = @transform_1, window_bounds = array<i64: 1, 50>}, {transform_indices = @transform_2, window_bounds = array<i64: 1>}, {transform_indices = @transform_3, window_bounds = array<i64: 1, 128>}]} {
    %c0 = arith.constant 0 : index
    %c0_0 = arith.constant 0 : index
    %0 = vector.load %arg1[%c0, %c0_0] : memref<128x50xf32, #tpu.memory_space<vmem>>, vector<128x50xf32>
    %c0_1 = arith.constant 0 : index
    %c0_2 = arith.constant 0 : index
    %1 = vector.load %arg2[%c0_1, %c0_2] : memref<1x50xf32, #tpu.memory_space<vmem>>, vector<1x50xf32>
    %cst = arith.constant dense<0.000000e+00> : vector<1x128xf32>
    %2 = tpu.matmul %1, %0, %cst {dimension_numbers = #tpu.dot_dimension_numbers<[1], [1], [0], [0], [0, 0, 1, 0], [], []>, precision = #tpu.contract_precision<fp32>} : vector<1x50xf32>, vector<128x50xf32>, vector<1x128xf32> -> vector<1x128xf32>
    %c0_3 = arith.constant 0 : index
    %3 = memref.load %arg3[%c0_3] : memref<1xf32, #tpu.memory_space<smem>>
    %4 = vector.broadcast %3 : f32 to vector<1x128xf32>
    %5 = arith.addf %2, %4 : vector<1x128xf32>
    %c0_4 = arith.constant 0 : index
    %c0_5 = arith.constant 0 : index
    %6 = vector.load %arg4[%c0_4, %c0_5] : memref<1x128xf32, #tpu.memory_space<vmem>>, vector<1x128xf32>
    tpu.vector_store %arg4[%c0_4, %c0_5], %5 {strides = array<i32>} : memref<1x128xf32, #tpu.memory_space<vmem>>, vector<1x128xf32>,
    return
  }
  func.func @transform_0(%arg0: i32) -> (i32, i32) {
    %c0_i32 = arith.constant 0 : i32
    %c0_i32_0 = arith.constant 0 : i32
    return %arg0, %c0_i32 : i32, i32
  }
  func.func @transform_1(%arg0: i32) -> (i32, i32) {
    %c0_i32 = arith.constant 0 : i32
    %c0_i32_0 = arith.constant 0 : i32
    %c0_i32_1 = arith.constant 0 : i32
    return %c0_i32, %c0_i32_0 : i32, i32
  }
  func.func @transform_2(%arg0: i32) -> i32 {
    %c0_i32 = arith.constant 0 : i32
    %c0_i32_0 = arith.constant 0 : i32
    return %c0_i32 : i32
  }
  func.func @transform_3(%arg0: i32) -> (i32, i32) {
    %c0_i32 = arith.constant 0 : i32
    %c0_i32_0 = arith.constant 0 : i32
    return %arg0, %c0_i32 : i32, i32
  }
}

</mosaic_0001>

<llo_original>
// kernel: tpu_custom_call.1
$region0: #{tpu_custom_call.1}
  #allocation0 [shape = 'u32[]', space=smem, size = 0x4, offset = 0x4, fixed_abs, tag = 'smem constant byte address 0x4 - core index']
  #allocation1 [shape = 'u32[144,128]{1,0:T(1,128)}', space=vmem, size = 0x12000, scoped, tag = 'internal scratch']
  #allocation2 [shape = 'f32[1]{0:T(128)S(6)}', space=smem, size = 0x200, scoped, tag = 'scoped memory for tpu_custom_call.1']
  %s0 = inlined_call_operand.hbm [shape: f32[16,50], index: 0, kind: input, shape index: {}]
  %s1 = inlined_call_operand.vmem [shape: f32[1,50], index: 1, kind: input, shape index: {}]
  %s2 = inlined_call_operand.<no memory space> [shape: f32[1], index: 2, kind: input, shape index: {}]
  %s3 = inlined_call_operand.hbm [shape: f32[1,128], index: 3, kind: output, shape index: {}]
  %s4 = sld [smem:[#allocation0]]
  $region26: #{tpu_custom_call.1} parent=0
    _
  %s6 = ssub.s32 1, %s4
  %s7 = scalar_select 0, %s6, %s4
  %8 = sst [smem:[#allocation2]] %s2
  $region1: #{tpu_custom_call.1} parent=0
    #allocation3 [shape = 'u8[65536]{0}', space=vmem, size = 0x10000, scoped, tag = 'input window, operand 0, single buffered']
    #allocation4 [shape = 's32[1]{0}', space=sflag, size = 0x4, scoped, tag = 'scoped memory for tpu_custom_call.1']
    #allocation5 [shape = 's32[1]{0}', space=sflag, size = 0x4, scoped, tag = 'scoped memory for tpu_custom_call.1']
    #allocation6 [shape = 'u8[512]{0}', space=vmem, size = 0x400, scoped, tag = 'output window, operand 0, single buffered']
    %9 = vsyncpa [#allocation4], 0
    %10 = vsyncpa [#allocation5], 0
    // Predicated region
    $region2: #{tpu_custom_call.1} parent=1 // pred_check
      _
    $region3: #{tpu_custom_call.1} parent=1 // pred_check_branch
      %12 = sbr.rel (0) target = $region5
    $region4: #{tpu_custom_call.1} parent=1 // pred_region
      %s14 = ssub.s32 2048, 256
      %15 = vsyncadd [#allocation4], %s14
      %s16 = sshll.u32 [#allocation3], 4
      %s17 = int_to_ptr.vmem [resolvable:$true] %s16
      %22 = dma.hbm_to_vmem [thread:$0]  %s0, 256, %s17, [#allocation4], 128, 128, 8
    $region5: #{tpu_custom_call.1} parent=1 // pred_fallthru
      _
    // Predicated region
    $region6: #{tpu_custom_call.1} parent=1 // pred_check
      _
    $region7: #{tpu_custom_call.1} parent=1 // pred_check_branch
      %24 = sbr.rel (0) target = $region9
    $region8: #{tpu_custom_call.1} parent=1 // pred_region
      _
    $region9: #{tpu_custom_call.1} parent=1 // pred_fallthru
      _
    // Predicated region
    $region10: #{tpu_custom_call.1} parent=1 // pred_check
      _
    $region11: #{tpu_custom_call.1} parent=1 // pred_check_branch
      %26 = sbr.rel (0) target = $region13
    $region12: #{tpu_custom_call.1} parent=1 // pred_region
      _
    $region13: #{tpu_custom_call.1} parent=1 // pred_fallthru
      _
    // Predicated region
    $region14: #{tpu_custom_call.1} parent=1 // pred_check
      _
    $region15: #{tpu_custom_call.1} parent=1 // pred_check_branch
      %28 = sbr.rel (0) target = $region17
    $region16: #{tpu_custom_call.1} parent=1 // pred_region
      %29 = dma.done [#allocation4], 2048
    $region17: #{tpu_custom_call.1} parent=1 // pred_fallthru
      _
    %v30 = vld [vmem:[#allocation3] sm:$0xff]
    %v31 = vld [vmem:[#allocation3 + $0x8] sm:$0xff]
    %v32 = vld [vmem:[#allocation3 + $0x10] sm:$0xff]
    %v33 = vld [vmem:[#allocation3 + $0x18] sm:$0xff]
    %v34 = vld [vmem:[#allocation3 + $0x20] sm:$0xff]
    %v35 = vld [vmem:[#allocation3 + $0x28] sm:$0xff]
    %v36 = vld [vmem:[#allocation3 + $0x30] sm:$0xff]
    %v37 = vld [vmem:[#allocation3 + $0x38] sm:$0xff]
    %v38 = vld [vmem:[#allocation3 + $0x40] sm:$0xff]
    %v39 = vld [vmem:[#allocation3 + $0x48] sm:$0xff]
    %v40 = vld [vmem:[#allocation3 + $0x50] sm:$0xff]
    %v41 = vld [vmem:[#allocation3 + $0x58] sm:$0xff]
    %v42 = vld [vmem:[#allocation3 + $0x60] sm:$0xff]
    %v43 = vld [vmem:[#allocation3 + $0x68] sm:$0xff]
    %v44 = vld [vmem:[#allocation3 + $0x70] sm:$0xff]
    %v45 = vld [vmem:[#allocation3 + $0x78] sm:$0xff]
    %v46 = vld [vmem:[%s1] sm:$0x1]
    %s47 = sld [smem:[#allocation2]]
    %v48 = vstv %s47
    %vm49 = vcmask 408576
    %v51 = vsel %vm49, %v46, 0
    %v54 = vsel %vm49, %v30, 0
    %v57 = vsel %vm49, %v31, 0
    %v60 = vsel %vm49, %v32, 0
    %v63 = vsel %vm49, %v33, 0
    %v66 = vsel %vm49, %v34, 0
    %v69 = vsel %vm49, %v35, 0
    %v72 = vsel %vm49, %v36, 0
    %v75 = vsel %vm49, %v37, 0
    %v78 = vsel %vm49, %v38, 0
    %v81 = vsel %vm49, %v39, 0
    %v84 = vsel %vm49, %v40, 0
    %v87 = vsel %vm49, %v41, 0
    %v90 = vsel %vm49, %v42, 0
    %v93 = vsel %vm49, %v43, 0
    %v96 = vsel %vm49, %v44, 0
    %v99 = vsel %vm49, %v45, 0
    %101 = vmatprep.subr.mxu0 0.0
    %v102 = vand.u32 %v99, 4294901760
    %103 = vmatpush1.xpose.msra.mxu0 %v102
    %104 = vmatprep.subr.mxu0 0.0
    %v105 = vand.u32 %v96, 4294901760
    %106 = vmatpush1.xpose.msra.mxu0 %v105
    %107 = vmatprep.subr.mxu0 0.0
    %v108 = vand.u32 %v93, 4294901760
    %109 = vmatpush1.xpose.msra.mxu0 %v108
    %110 = vmatprep.subr.mxu0 0.0
    %v111 = vand.u32 %v90, 4294901760
    %112 = vmatpush1.xpose.msra.mxu0 %v111
    %113 = vmatprep.subr.mxu0 0.0
    %v114 = vand.u32 %v87, 4294901760
    %115 = vmatpush1.xpose.msra.mxu0 %v114
    %116 = vmatprep.subr.mxu0 0.0
    %v117 = vand.u32 %v84, 4294901760
    %118 = vmatpush1.xpose.msra.mxu0 %v117
    %119 = vmatprep.subr.mxu0 0.0
    %v120 = vand.u32 %v81, 4294901760
    %121 = vmatpush1.xpose.msra.mxu0 %v120
    %122 = vmatprep.subr.mxu0 0.0
    %v123 = vand.u32 %v78, 4294901760
    %124 = vmatpush1.xpose.msra.mxu0 %v123
    %125 = vmatprep.subr.mxu0 0.0
    %v126 = vand.u32 %v75, 4294901760
    %127 = vmatpush1.xpose.msra.mxu0 %v126
    %128 = vmatprep.subr.mxu0 0.0
    %v129 = vand.u32 %v72, 4294901760
    %130 = vmatpush1.xpose.msra.mxu0 %v129
    %131 = vmatprep.subr.mxu0 0.0
    %v132 = vand.u32 %v69, 4294901760
    %133 = vmatpush1.xpose.msra.mxu0 %v132
    %134 = vmatprep.subr.mxu0 0.0
    %v135 = vand.u32 %v66, 4294901760
    %136 = vmatpush1.xpose.msra.mxu0 %v135
    %137 = vmatprep.subr.mxu0 0.0
    %v138 = vand.u32 %v63, 4294901760
    %139 = vmatpush1.xpose.msra.mxu0 %v138
    %140 = vmatprep.subr.mxu0 0.0
    %v141 = vand.u32 %v60, 4294901760
    %142 = vmatpush1.xpose.msra.mxu0 %v141
    %143 = vmatprep.subr.mxu0 0.0
    %v144 = vand.u32 %v57, 4294901760
    %145 = vmatpush1.xpose.msra.mxu0 %v144
    %146 = vmatprep.subr.mxu0 0.0
    %v147 = vand.u32 %v54, 4294901760
    %148 = vmatpush1.xpose.msra.mxu0 %v147
    %149 = vmatprep.subr.mxu0 0.0
    %150 = vmatpush2.xpose.msra.mxu0 0.0
    %151 = vmatprep.subr.mxu0 0.0
    %152 = vmatpush2.xpose.msra.mxu0 0.0
    %153 = vmatprep.subr.mxu0 0.0
    %154 = vmatpush2.xpose.msra.mxu0 0.0
    %155 = vmatprep.subr.mxu0 0.0
    %156 = vmatpush2.xpose.msra.mxu0 0.0
    %157 = vmatprep.subr.mxu0 0.0
    %158 = vmatpush2.xpose.msra.mxu0 0.0
    %159 = vmatprep.subr.mxu0 0.0
    %160 = vmatpush2.xpose.msra.mxu0 0.0
    %161 = vmatprep.subr.mxu0 0.0
    %162 = vmatpush2.xpose.msra.mxu0 0.0
    %163 = vmatprep.subr.mxu0 0.0
    %164 = vmatpush2.xpose.msra.mxu0 0.0
    %165 = vmatprep.subr.mxu0 0.0
    %166 = vmatpush2.xpose.msra.mxu0 0.0
    %167 = vmatprep.subr.mxu0 0.0
    %168 = vmatpush2.xpose.msra.mxu0 0.0
    %169 = vmatprep.subr.mxu0 0.0
    %170 = vmatpush2.xpose.msra.mxu0 0.0
    %171 = vmatprep.subr.mxu0 0.0
    %172 = vmatpush2.xpose.msra.mxu0 0.0
    %173 = vmatprep.subr.mxu0 0.0
    %174 = vmatpush2.xpose.msra.mxu0 0.0
    %175 = vmatprep.subr.mxu0 0.0
    %176 = vmatpush2.xpose.msra.mxu0 0.0
    %177 = vmatprep.subr.mxu0 0.0
    %178 = vmatpush2.xpose.msra.mxu0 0.0
    %179 = vmatprep.subr.mxu0 0.0
    %180 = vmatpush2.xpose.msra.mxu0 0.0
    %181 = vmatprep.mubr.f32.mxu0 0.0
    %v182 = vand.u32 %v51, 4294901760
    %v183 = vsub.f32 %v51, %v182
    %v184 = vand.u32 %v183, 4294901760
    %v185 = vsub.f32 %v183, %v184
    %v186 = vand.u32 %v185, 4294901760
    %187 = vmatmul.mubr.f32.gmra.mxu0 %v186
    %v188 = vpop.f32.mrf.mxu0
    %v189 = vadd.f32 %v48, %v188
    %v190 = vpop.f32.mrf.mxu0
    %191 = vdwg.mxu0
    %192 = vmatprep.subr.mxu0 0.0
    %v193 = vand.u32 %v99, 4294901760
    %v194 = vsub.f32 %v99, %v193
    %v195 = vand.u32 %v194, 4294901760
    %v196 = vsub.f32 %v194, %v195
    %v197 = vand.u32 %v196, 4294901760
    %198 = vmatpush1.xpose.msra.mxu0 %v197
    %199 = vmatprep.subr.mxu0 0.0
    %v200 = vand.u32 %v96, 4294901760
    %v201 = vsub.f32 %v96, %v200
    %v202 = vand.u32 %v201, 4294901760
    %v203 = vsub.f32 %v201, %v202
    %v204 = vand.u32 %v203, 4294901760
    %205 = vmatpush1.xpose.msra.mxu0 %v204
    %206 = vmatprep.subr.mxu0 0.0
    %v207 = vand.u32 %v93, 4294901760
    %v208 = vsub.f32 %v93, %v207
    %v209 = vand.u32 %v208, 4294901760
    %v210 = vsub.f32 %v208, %v209
    %v211 = vand.u32 %v210, 4294901760
    %212 = vmatpush1.xpose.msra.mxu0 %v211
    %213 = vmatprep.subr.mxu0 0.0
    %v214 = vand.u32 %v90, 4294901760
    %v215 = vsub.f32 %v90, %v214
    %v216 = vand.u32 %v215, 4294901760
    %v217 = vsub.f32 %v215, %v216
    %v218 = vand.u32 %v217, 4294901760
    %219 = vmatpush1.xpose.msra.mxu0 %v218
    %220 = vmatprep.subr.mxu0 0.0
    %v221 = vand.u32 %v87, 4294901760
    %v222 = vsub.f32 %v87, %v221
    %v223 = vand.u32 %v222, 4294901760
    %v224 = vsub.f32 %v222, %v223
    %v225 = vand.u32 %v224, 4294901760
    %226 = vmatpush1.xpose.msra.mxu0 %v225
    %227 = vmatprep.subr.mxu0 0.0
    %v228 = vand.u32 %v84, 4294901760
    %v229 = vsub.f32 %v84, %v228
    %v230 = vand.u32 %v229, 4294901760
    %v231 = vsub.f32 %v229, %v230
    %v232 = vand.u32 %v231, 4294901760
    %233 = vmatpush1.xpose.msra.mxu0 %v232
    %234 = vmatprep.subr.mxu0 0.0
    %v235 = vand.u32 %v81, 4294901760
    %v236 = vsub.f32 %v81, %v235
    %v237 = vand.u32 %v236, 4294901760
    %v238 = vsub.f32 %v236, %v237
    %v239 = vand.u32 %v238, 4294901760
    %240 = vmatpush1.xpose.msra.mxu0 %v239
    %241 = vmatprep.subr.mxu0 0.0
    %v242 = vand.u32 %v78, 4294901760
    %v243 = vsub.f32 %v78, %v242
    %v244 = vand.u32 %v243, 4294901760
    %v245 = vsub.f32 %v243, %v244
    %v246 = vand.u32 %v245, 4294901760
    %247 = vmatpush1.xpose.msra.mxu0 %v246
    %248 = vmatprep.subr.mxu0 0.0
    %v249 = vand.u32 %v75, 4294901760
    %v250 = vsub.f32 %v75, %v249
    %v251 = vand.u32 %v250, 4294901760
    %v252 = vsub.f32 %v250, %v251
    %v253 = vand.u32 %v252, 4294901760
    %254 = vmatpush1.xpose.msra.mxu0 %v253
    %255 = vmatprep.subr.mxu0 0.0
    %v256 = vand.u32 %v72, 4294901760
    %v257 = vsub.f32 %v72, %v256
    %v258 = vand.u32 %v257, 4294901760
    %v259 = vsub.f32 %v257, %v258
    %v260 = vand.u32 %v259, 4294901760
    %261 = vmatpush1.xpose.msra.mxu0 %v260
    %262 = vmatprep.subr.mxu0 0.0
    %v263 = vand.u32 %v69, 4294901760
    %v264 = vsub.f32 %v69, %v263
    %v265 = vand.u32 %v264, 4294901760
    %v266 = vsub.f32 %v264, %v265
    %v267 = vand.u32 %v266, 4294901760
    %268 = vmatpush1.xpose.msra.mxu0 %v267
    %269 = vmatprep.subr.mxu0 0.0
    %v270 = vand.u32 %v66, 4294901760
    %v271 = vsub.f32 %v66, %v270
    %v272 = vand.u32 %v271, 4294901760
    %v273 = vsub.f32 %v271, %v272
    %v274 = vand.u32 %v273, 4294901760
    %275 = vmatpush1.xpose.msra.mxu0 %v274
    %276 = vmatprep.subr.mxu0 0.0
    %v277 = vand.u32 %v63, 4294901760
    %v278 = vsub.f32 %v63, %v277
    %v279 = vand.u32 %v278, 4294901760
    %v280 = vsub.f32 %v278, %v279
    %v281 = vand.u32 %v280, 4294901760
    %282 = vmatpush1.xpose.msra.mxu0 %v281
    %283 = vmatprep.subr.mxu0 0.0
    %v284 = vand.u32 %v60, 4294901760
    %v285 = vsub.f32 %v60, %v284
    %v286 = vand.u32 %v285, 4294901760
    %v287 = vsub.f32 %v285, %v286
    %v288 = vand.u32 %v287, 4294901760
    %289 = vmatpush1.xpose.msra.mxu0 %v288
    %290 = vmatprep.subr.mxu0 0.0
    %v291 = vand.u32 %v57, 4294901760
    %v292 = vsub.f32 %v57, %v291
    %v293 = vand.u32 %v292, 4294901760
    %v294 = vsub.f32 %v292, %v293
    %v295 = vand.u32 %v294, 4294901760
    %296 = vmatpush1.xpose.msra.mxu0 %v295
    %297 = vmatprep.subr.mxu0 0.0
    %v298 = vand.u32 %v54, 4294901760
    %v299 = vsub.f32 %v54, %v298
    %v300 = vand.u32 %v299, 4294901760
    %v301 = vsub.f32 %v299, %v300
    %v302 = vand.u32 %v301, 4294901760
    %303 = vmatpush1.xpose.msra.mxu0 %v302
    %304 = vmatprep.subr.mxu0 0.0
    %305 = vmatpush2.xpose.msra.mxu0 0.0
    %306 = vmatprep.subr.mxu0 0.0
    %307 = vmatpush2.xpose.msra.mxu0 0.0
    %308 = vmatprep.subr.mxu0 0.0
    %309 = vmatpush2.xpose.msra.mxu0 0.0
    %310 = vmatprep.subr.mxu0 0.0
    %311 = vmatpush2.xpose.msra.mxu0 0.0
    %312 = vmatprep.subr.mxu0 0.0
    %313 = vmatpush2.xpose.msra.mxu0 0.0
    %314 = vmatprep.subr.mxu0 0.0
    %315 = vmatpush2.xpose.msra.mxu0 0.0
    %316 = vmatprep.subr.mxu0 0.0
    %317 = vmatpush2.xpose.msra.mxu0 0.0
    %318 = vmatprep.subr.mxu0 0.0
    %319 = vmatpush2.xpose.msra.mxu0 0.0
    %320 = vmatprep.subr.mxu0 0.0
    %321 = vmatpush2.xpose.msra.mxu0 0.0
    %322 = vmatprep.subr.mxu0 0.0
    %323 = vmatpush2.xpose.msra.mxu0 0.0
    %324 = vmatprep.subr.mxu0 0.0
    %325 = vmatpush2.xpose.msra.mxu0 0.0
    %326 = vmatprep.subr.mxu0 0.0
    %327 = vmatpush2.xpose.msra.mxu0 0.0
    %328 = vmatprep.subr.mxu0 0.0
    %329 = vmatpush2.xpose.msra.mxu0 0.0
    %330 = vmatprep.subr.mxu0 0.0
    %331 = vmatpush2.xpose.msra.mxu0 0.0
    %332 = vmatprep.subr.mxu0 0.0
    %333 = vmatpush2.xpose.msra.mxu0 0.0
    %334 = vmatprep.subr.mxu0 0.0
    %335 = vmatpush2.xpose.msra.mxu0 0.0
    %336 = vmatprep.mubr.f32.mxu0 0.0
    %v337 = vand.u32 %v51, 4294901760
    %338 = vmatmul.mubr.f32.gmra.mxu0 %v337
    %v339 = vpop.f32.mrf.mxu0
    %v340 = vadd.f32 %v189, %v339
    %v341 = vpop.f32.mrf.mxu0
    %342 = vdwg.mxu0
    %343 = vmatprep.subr.mxu0 0.0
    %v344 = vand.u32 %v99, 4294901760
    %v345 = vsub.f32 %v99, %v344
    %346 = vmatpush1.xpose.msra.mxu0 %v345
    %347 = vmatprep.subr.mxu0 0.0
    %v348 = vand.u32 %v96, 4294901760
    %v349 = vsub.f32 %v96, %v348
    %350 = vmatpush1.xpose.msra.mxu0 %v349
    %351 = vmatprep.subr.mxu0 0.0
    %v352 = vand.u32 %v93, 4294901760
    %v353 = vsub.f32 %v93, %v352
    %354 = vmatpush1.xpose.msra.mxu0 %v353
    %355 = vmatprep.subr.mxu0 0.0
    %v356 = vand.u32 %v90, 4294901760
    %v357 = vsub.f32 %v90, %v356
    %358 = vmatpush1.xpose.msra.mxu0 %v357
    %359 = vmatprep.subr.mxu0 0.0
    %v360 = vand.u32 %v87, 4294901760
    %v361 = vsub.f32 %v87, %v360
    %362 = vmatpush1.xpose.msra.mxu0 %v361
    %363 = vmatprep.subr.mxu0 0.0
    %v364 = vand.u32 %v84, 4294901760
    %v365 = vsub.f32 %v84, %v364
    %366 = vmatpush1.xpose.msra.mxu0 %v365
    %367 = vmatprep.subr.mxu0 0.0
    %v368 = vand.u32 %v81, 4294901760
    %v369 = vsub.f32 %v81, %v368
    %370 = vmatpush1.xpose.msra.mxu0 %v369
    %371 = vmatprep.subr.mxu0 0.0
    %v372 = vand.u32 %v78, 4294901760
    %v373 = vsub.f32 %v78, %v372
    %374 = vmatpush1.xpose.msra.mxu0 %v373
    %375 = vmatprep.subr.mxu0 0.0
    %v376 = vand.u32 %v75, 4294901760
    %v377 = vsub.f32 %v75, %v376
    %378 = vmatpush1.xpose.msra.mxu0 %v377
    %379 = vmatprep.subr.mxu0 0.0
    %v380 = vand.u32 %v72, 4294901760
    %v381 = vsub.f32 %v72, %v380
    %382 = vmatpush1.xpose.msra.mxu0 %v381
    %383 = vmatprep.subr.mxu0 0.0
    %v384 = vand.u32 %v69, 4294901760
    %v385 = vsub.f32 %v69, %v384
    %386 = vmatpush1.xpose.msra.mxu0 %v385
    %387 = vmatprep.subr.mxu0 0.0
    %v388 = vand.u32 %v66, 4294901760
    %v389 = vsub.f32 %v66, %v388
    %390 = vmatpush1.xpose.msra.mxu0 %v389
    %391 = vmatprep.subr.mxu0 0.0
    %v392 = vand.u32 %v63, 4294901760
    %v393 = vsub.f32 %v63, %v392
    %394 = vmatpush1.xpose.msra.mxu0 %v393
    %395 = vmatprep.subr.mxu0 0.0
    %v396 = vand.u32 %v60, 4294901760
    %v397 = vsub.f32 %v60, %v396
    %398 = vmatpush1.xpose.msra.mxu0 %v397
    %399 = vmatprep.subr.mxu0 0.0
    %v400 = vand.u32 %v57, 4294901760
    %v401 = vsub.f32 %v57, %v400
    %402 = vmatpush1.xpose.msra.mxu0 %v401
    %403 = vmatprep.subr.mxu0 0.0
    %v404 = vand.u32 %v54, 4294901760
    %v405 = vsub.f32 %v54, %v404
    %406 = vmatpush1.xpose.msra.mxu0 %v405
    %407 = vmatprep.subr.mxu0 0.0
    %408 = vmatpush2.xpose.msra.mxu0 0.0
    %409 = vmatprep.subr.mxu0 0.0
    %410 = vmatpush2.xpose.msra.mxu0 0.0
    %411 = vmatprep.subr.mxu0 0.0
    %412 = vmatpush2.xpose.msra.mxu0 0.0
    %413 = vmatprep.subr.mxu0 0.0
    %414 = vmatpush2.xpose.msra.mxu0 0.0
    %415 = vmatprep.subr.mxu0 0.0
    %416 = vmatpush2.xpose.msra.mxu0 0.0
    %417 = vmatprep.subr.mxu0 0.0
    %418 = vmatpush2.xpose.msra.mxu0 0.0
    %419 = vmatprep.subr.mxu0 0.0
    %420 = vmatpush2.xpose.msra.mxu0 0.0
    %421 = vmatprep.subr.mxu0 0.0
    %422 = vmatpush2.xpose.msra.mxu0 0.0
    %423 = vmatprep.subr.mxu0 0.0
    %424 = vmatpush2.xpose.msra.mxu0 0.0
    %425 = vmatprep.subr.mxu0 0.0
    %426 = vmatpush2.xpose.msra.mxu0 0.0
    %427 = vmatprep.subr.mxu0 0.0
    %428 = vmatpush2.xpose.msra.mxu0 0.0
    %429 = vmatprep.subr.mxu0 0.0
    %430 = vmatpush2.xpose.msra.mxu0 0.0
    %431 = vmatprep.subr.mxu0 0.0
    %432 = vmatpush2.xpose.msra.mxu0 0.0
    %433 = vmatprep.subr.mxu0 0.0
    %434 = vmatpush2.xpose.msra.mxu0 0.0
    %435 = vmatprep.subr.mxu0 0.0
    %436 = vmatpush2.xpose.msra.mxu0 0.0
    %437 = vmatprep.subr.mxu0 0.0
    %438 = vmatpush2.xpose.msra.mxu0 0.0
    %439 = vmatprep.mubr.f32.mxu0 0.0
    %v440 = vand.u32 %v51, 4294901760
    %v441 = vsub.f32 %v51, %v440
    %442 = vmatmul.mubr.f32.gmra.mxu0 %v441
    %v443 = vpop.f32.mrf.mxu0
    %v444 = vadd.f32 %v340, %v443
    %v445 = vpop.f32.mrf.mxu0
    %446 = vdwg.mxu0
    %447 = vmatprep.subr.mxu0 0.0
    %v448 = vand.u32 %v99, 4294901760
    %449 = vmatpush1.xpose.msra.mxu0 %v448
    %450 = vmatprep.subr.mxu0 0.0
    %v451 = vand.u32 %v96, 4294901760
    %452 = vmatpush1.xpose.msra.mxu0 %v451
    %453 = vmatprep.subr.mxu0 0.0
    %v454 = vand.u32 %v93, 4294901760
    %455 = vmatpush1.xpose.msra.mxu0 %v454
    %456 = vmatprep.subr.mxu0 0.0
    %v457 = vand.u32 %v90, 4294901760
    %458 = vmatpush1.xpose.msra.mxu0 %v457
    %459 = vmatprep.subr.mxu0 0.0
    %v460 = vand.u32 %v87, 4294901760
    %461 = vmatpush1.xpose.msra.mxu0 %v460
    %462 = vmatprep.subr.mxu0 0.0
    %v463 = vand.u32 %v84, 4294901760
    %464 = vmatpush1.xpose.msra.mxu0 %v463
    %465 = vmatprep.subr.mxu0 0.0
    %v466 = vand.u32 %v81, 4294901760
    %467 = vmatpush1.xpose.msra.mxu0 %v466
    %468 = vmatprep.subr.mxu0 0.0
    %v469 = vand.u32 %v78, 4294901760
    %470 = vmatpush1.xpose.msra.mxu0 %v469
    %471 = vmatprep.subr.mxu0 0.0
    %v472 = vand.u32 %v75, 4294901760
    %473 = vmatpush1.xpose.msra.mxu0 %v472
    %474 = vmatprep.subr.mxu0 0.0
    %v475 = vand.u32 %v72, 4294901760
    %476 = vmatpush1.xpose.msra.mxu0 %v475
    %477 = vmatprep.subr.mxu0 0.0
    %v478 = vand.u32 %v69, 4294901760
    %479 = vmatpush1.xpose.msra.mxu0 %v478
    %480 = vmatprep.subr.mxu0 0.0
    %v481 = vand.u32 %v66, 4294901760
    %482 = vmatpush1.xpose.msra.mxu0 %v481
    %483 = vmatprep.subr.mxu0 0.0
    %v484 = vand.u32 %v63, 4294901760
    %485 = vmatpush1.xpose.msra.mxu0 %v484
    %486 = vmatprep.subr.mxu0 0.0
    %v487 = vand.u32 %v60, 4294901760
    %488 = vmatpush1.xpose.msra.mxu0 %v487
    %489 = vmatprep.subr.mxu0 0.0
    %v490 = vand.u32 %v57, 4294901760
    %491 = vmatpush1.xpose.msra.mxu0 %v490
    %492 = vmatprep.subr.mxu0 0.0
    %v493 = vand.u32 %v54, 4294901760
    %494 = vmatpush1.xpose.msra.mxu0 %v493
    %495 = vmatprep.subr.mxu0 0.0
    %496 = vmatpush2.xpose.msra.mxu0 0.0
    %497 = vmatprep.subr.mxu0 0.0
    %498 = vmatpush2.xpose.msra.mxu0 0.0
    %499 = vmatprep.subr.mxu0 0.0
    %500 = vmatpush2.xpose.msra.mxu0 0.0
    %501 = vmatprep.subr.mxu0 0.0
    %502 = vmatpush2.xpose.msra.mxu0 0.0
    %503 = vmatprep.subr.mxu0 0.0
    %504 = vmatpush2.xpose.msra.mxu0 0.0
    %505 = vmatprep.subr.mxu0 0.0
    %506 = vmatpush2.xpose.msra.mxu0 0.0
    %507 = vmatprep.subr.mxu0 0.0
    %508 = vmatpush2.xpose.msra.mxu0 0.0
    %509 = vmatprep.subr.mxu0 0.0
    %510 = vmatpush2.xpose.msra.mxu0 0.0
    %511 = vmatprep.subr.mxu0 0.0
    %512 = vmatpush2.xpose.msra.mxu0 0.0
    %513 = vmatprep.subr.mxu0 0.0
    %514 = vmatpush2.xpose.msra.mxu0 0.0
    %515 = vmatprep.subr.mxu0 0.0
    %516 = vmatpush2.xpose.msra.mxu0 0.0
    %517 = vmatprep.subr.mxu0 0.0
    %518 = vmatpush2.xpose.msra.mxu0 0.0
    %519 = vmatprep.subr.mxu0 0.0
    %520 = vmatpush2.xpose.msra.mxu0 0.0
    %521 = vmatprep.subr.mxu0 0.0
    %522 = vmatpush2.xpose.msra.mxu0 0.0
    %523 = vmatprep.subr.mxu0 0.0
    %524 = vmatpush2.xpose.msra.mxu0 0.0
    %525 = vmatprep.subr.mxu0 0.0
    %526 = vmatpush2.xpose.msra.mxu0 0.0
    %527 = vmatprep.mubr.f32.mxu0 0.0
    %v528 = vand.u32 %v51, 4294901760
    %v529 = vsub.f32 %v51, %v528
    %v530 = vand.u32 %v529, 4294901760
    %531 = vmatmul.mubr.f32.gmra.mxu0 %v530
    %v532 = vpop.f32.mrf.mxu0
    %v533 = vadd.f32 %v444, %v532
    %v534 = vpop.f32.mrf.mxu0
    %535 = vdwg.mxu0
    %536 = vmatprep.subr.mxu0 0.0
    %v537 = vand.u32 %v99, 4294901760
    %v538 = vsub.f32 %v99, %v537
    %v539 = vand.u32 %v538, 4294901760
    %540 = vmatpush1.xpose.msra.mxu0 %v539
    %541 = vmatprep.subr.mxu0 0.0
    %v542 = vand.u32 %v96, 4294901760
    %v543 = vsub.f32 %v96, %v542
    %v544 = vand.u32 %v543, 4294901760
    %545 = vmatpush1.xpose.msra.mxu0 %v544
    %546 = vmatprep.subr.mxu0 0.0
    %v547 = vand.u32 %v93, 4294901760
    %v548 = vsub.f32 %v93, %v547
    %v549 = vand.u32 %v548, 4294901760
    %550 = vmatpush1.xpose.msra.mxu0 %v549
    %551 = vmatprep.subr.mxu0 0.0
    %v552 = vand.u32 %v90, 4294901760
    %v553 = vsub.f32 %v90, %v552
    %v554 = vand.u32 %v553, 4294901760
    %555 = vmatpush1.xpose.msra.mxu0 %v554
    %556 = vmatprep.subr.mxu0 0.0
    %v557 = vand.u32 %v87, 4294901760
    %v558 = vsub.f32 %v87, %v557
    %v559 = vand.u32 %v558, 4294901760
    %560 = vmatpush1.xpose.msra.mxu0 %v559
    %561 = vmatprep.subr.mxu0 0.0
    %v562 = vand.u32 %v84, 4294901760
    %v563 = vsub.f32 %v84, %v562
    %v564 = vand.u32 %v563, 4294901760
    %565 = vmatpush1.xpose.msra.mxu0 %v564
    %566 = vmatprep.subr.mxu0 0.0
    %v567 = vand.u32 %v81, 4294901760
    %v568 = vsub.f32 %v81, %v567
    %v569 = vand.u32 %v568, 4294901760
    %570 = vmatpush1.xpose.msra.mxu0 %v569
    %571 = vmatprep.subr.mxu0 0.0
    %v572 = vand.u32 %v78, 4294901760
    %v573 = vsub.f32 %v78, %v572
    %v574 = vand.u32 %v573, 4294901760
    %575 = vmatpush1.xpose.msra.mxu0 %v574
    %576 = vmatprep.subr.mxu0 0.0
    %v577 = vand.u32 %v75, 4294901760
    %v578 = vsub.f32 %v75, %v577
    %v579 = vand.u32 %v578, 4294901760
    %580 = vmatpush1.xpose.msra.mxu0 %v579
    %581 = vmatprep.subr.mxu0 0.0
    %v582 = vand.u32 %v72, 4294901760
    %v583 = vsub.f32 %v72, %v582
    %v584 = vand.u32 %v583, 4294901760
    %585 = vmatpush1.xpose.msra.mxu0 %v584
    %586 = vmatprep.subr.mxu0 0.0
    %v587 = vand.u32 %v69, 4294901760
    %v588 = vsub.f32 %v69, %v587
    %v589 = vand.u32 %v588, 4294901760
    %590 = vmatpush1.xpose.msra.mxu0 %v589
    %591 = vmatprep.subr.mxu0 0.0
    %v592 = vand.u32 %v66, 4294901760
    %v593 = vsub.f32 %v66, %v592
    %v594 = vand.u32 %v593, 4294901760
    %595 = vmatpush1.xpose.msra.mxu0 %v594
    %596 = vmatprep.subr.mxu0 0.0
    %v597 = vand.u32 %v63, 4294901760
    %v598 = vsub.f32 %v63, %v597
    %v599 = vand.u32 %v598, 4294901760
    %600 = vmatpush1.xpose.msra.mxu0 %v599
    %601 = vmatprep.subr.mxu0 0.0
    %v602 = vand.u32 %v60, 4294901760
    %v603 = vsub.f32 %v60, %v602
    %v604 = vand.u32 %v603, 4294901760
    %605 = vmatpush1.xpose.msra.mxu0 %v604
    %606 = vmatprep.subr.mxu0 0.0
    %v607 = vand.u32 %v57, 4294901760
    %v608 = vsub.f32 %v57, %v607
    %v609 = vand.u32 %v608, 4294901760
    %610 = vmatpush1.xpose.msra.mxu0 %v609
    %611 = vmatprep.subr.mxu0 0.0
    %v612 = vand.u32 %v54, 4294901760
    %v613 = vsub.f32 %v54, %v612
    %v614 = vand.u32 %v613, 4294901760
    %615 = vmatpush1.xpose.msra.mxu0 %v614
    %616 = vmatprep.subr.mxu0 0.0
    %617 = vmatpush2.xpose.msra.mxu0 0.0
    %618 = vmatprep.subr.mxu0 0.0
    %619 = vmatpush2.xpose.msra.mxu0 0.0
    %620 = vmatprep.subr.mxu0 0.0
    %621 = vmatpush2.xpose.msra.mxu0 0.0
    %622 = vmatprep.subr.mxu0 0.0
    %623 = vmatpush2.xpose.msra.mxu0 0.0
    %624 = vmatprep.subr.mxu0 0.0
    %625 = vmatpush2.xpose.msra.mxu0 0.0
    %626 = vmatprep.subr.mxu0 0.0
    %627 = vmatpush2.xpose.msra.mxu0 0.0
    %628 = vmatprep.subr.mxu0 0.0
    %629 = vmatpush2.xpose.msra.mxu0 0.0
    %630 = vmatprep.subr.mxu0 0.0
    %631 = vmatpush2.xpose.msra.mxu0 0.0
    %632 = vmatprep.subr.mxu0 0.0
    %633 = vmatpush2.xpose.msra.mxu0 0.0
    %634 = vmatprep.subr.mxu0 0.0
    %635 = vmatpush2.xpose.msra.mxu0 0.0
    %636 = vmatprep.subr.mxu0 0.0
    %637 = vmatpush2.xpose.msra.mxu0 0.0
    %638 = vmatprep.subr.mxu0 0.0
    %639 = vmatpush2.xpose.msra.mxu0 0.0
    %640 = vmatprep.subr.mxu0 0.0
    %641 = vmatpush2.xpose.msra.mxu0 0.0
    %642 = vmatprep.subr.mxu0 0.0
    %643 = vmatpush2.xpose.msra.mxu0 0.0
    %644 = vmatprep.subr.mxu0 0.0
    %645 = vmatpush2.xpose.msra.mxu0 0.0
    %646 = vmatprep.subr.mxu0 0.0
    %647 = vmatpush2.xpose.msra.mxu0 0.0
    %648 = vmatprep.mubr.f32.mxu0 0.0
    %v649 = vand.u32 %v51, 4294901760
    %650 = vmatmul.mubr.f32.gmra.mxu0 %v649
    %v651 = vpop.f32.mrf.mxu0
    %v652 = vadd.f32 %v533, %v651
    %v653 = vpop.f32.mrf.mxu0
    %654 = vdwg.mxu0
    %655 = vmatprep.subr.mxu0 0.0
    %v656 = vand.u32 %v99, 4294901760
    %657 = vmatpush1.xpose.msra.mxu0 %v656
    %658 = vmatprep.subr.mxu0 0.0
    %v659 = vand.u32 %v96, 4294901760
    %660 = vmatpush1.xpose.msra.mxu0 %v659
    %661 = vmatprep.subr.mxu0 0.0
    %v662 = vand.u32 %v93, 4294901760
    %663 = vmatpush1.xpose.msra.mxu0 %v662
    %664 = vmatprep.subr.mxu0 0.0
    %v665 = vand.u32 %v90, 4294901760
    %666 = vmatpush1.xpose.msra.mxu0 %v665
    %667 = vmatprep.subr.mxu0 0.0
    %v668 = vand.u32 %v87, 4294901760
    %669 = vmatpush1.xpose.msra.mxu0 %v668
    %670 = vmatprep.subr.mxu0 0.0
    %v671 = vand.u32 %v84, 4294901760
    %672 = vmatpush1.xpose.msra.mxu0 %v671
    %673 = vmatprep.subr.mxu0 0.0
    %v674 = vand.u32 %v81, 4294901760
    %675 = vmatpush1.xpose.msra.mxu0 %v674
    %676 = vmatprep.subr.mxu0 0.0
    %v677 = vand.u32 %v78, 4294901760
    %678 = vmatpush1.xpose.msra.mxu0 %v677
    %679 = vmatprep.subr.mxu0 0.0
    %v680 = vand.u32 %v75, 4294901760
    %681 = vmatpush1.xpose.msra.mxu0 %v680
    %682 = vmatprep.subr.mxu0 0.0
    %v683 = vand.u32 %v72, 4294901760
    %684 = vmatpush1.xpose.msra.mxu0 %v683
    %685 = vmatprep.subr.mxu0 0.0
    %v686 = vand.u32 %v69, 4294901760
    %687 = vmatpush1.xpose.msra.mxu0 %v686
    %688 = vmatprep.subr.mxu0 0.0
    %v689 = vand.u32 %v66, 4294901760
    %690 = vmatpush1.xpose.msra.mxu0 %v689
    %691 = vmatprep.subr.mxu0 0.0
    %v692 = vand.u32 %v63, 4294901760
    %693 = vmatpush1.xpose.msra.mxu0 %v692
    %694 = vmatprep.subr.mxu0 0.0
    %v695 = vand.u32 %v60, 4294901760
    %696 = vmatpush1.xpose.msra.mxu0 %v695
    %697 = vmatprep.subr.mxu0 0.0
    %v698 = vand.u32 %v57, 4294901760
    %699 = vmatpush1.xpose.msra.mxu0 %v698
    %700 = vmatprep.subr.mxu0 0.0
    %v701 = vand.u32 %v54, 4294901760
    %702 = vmatpush1.xpose.msra.mxu0 %v701
    %703 = vmatprep.subr.mxu0 0.0
    %704 = vmatpush2.xpose.msra.mxu0 0.0
    %705 = vmatprep.subr.mxu0 0.0
    %706 = vmatpush2.xpose.msra.mxu0 0.0
    %707 = vmatprep.subr.mxu0 0.0
    %708 = vmatpush2.xpose.msra.mxu0 0.0
    %709 = vmatprep.subr.mxu0 0.0
    %710 = vmatpush2.xpose.msra.mxu0 0.0
    %711 = vmatprep.subr.mxu0 0.0
    %712 = vmatpush2.xpose.msra.mxu0 0.0
    %713 = vmatprep.subr.mxu0 0.0
    %714 = vmatpush2.xpose.msra.mxu0 0.0
    %715 = vmatprep.subr.mxu0 0.0
    %716 = vmatpush2.xpose.msra.mxu0 0.0
    %717 = vmatprep.subr.mxu0 0.0
    %718 = vmatpush2.xpose.msra.mxu0 0.0
    %719 = vmatprep.subr.mxu0 0.0
    %720 = vmatpush2.xpose.msra.mxu0 0.0
    %721 = vmatprep.subr.mxu0 0.0
    %722 = vmatpush2.xpose.msra.mxu0 0.0
    %723 = vmatprep.subr.mxu0 0.0
    %724 = vmatpush2.xpose.msra.mxu0 0.0
    %725 = vmatprep.subr.mxu0 0.0
    %726 = vmatpush2.xpose.msra.mxu0 0.0
    %727 = vmatprep.subr.mxu0 0.0
    %728 = vmatpush2.xpose.msra.mxu0 0.0
    %729 = vmatprep.subr.mxu0 0.0
    %730 = vmatpush2.xpose.msra.mxu0 0.0
    %731 = vmatprep.subr.mxu0 0.0
    %732 = vmatpush2.xpose.msra.mxu0 0.0
    %733 = vmatprep.subr.mxu0 0.0
    %734 = vmatpush2.xpose.msra.mxu0 0.0
    %735 = vmatprep.mubr.f32.mxu0 0.0
    %v736 = vand.u32 %v51, 4294901760
    %737 = vmatmul.mubr.f32.gmra.mxu0 %v736
    %v738 = vpop.f32.mrf.mxu0
    %v739 = vadd.f32 %v652, %v738
    %v740 = vpop.f32.mrf.mxu0
    %741 = vdwg.mxu0
    %742 = vst [vmem:[#allocation6] sm:$0x1] %v739
    // Predicated region
    $region18: #{tpu_custom_call.1} parent=1 // pred_check
      _
    $region19: #{tpu_custom_call.1} parent=1 // pred_check_branch
      %744 = sbr.rel (0) target = $region21
    $region20: #{tpu_custom_call.1} parent=1 // pred_region
      %s746 = ssub.s32 16, 16
      %747 = vsyncadd [#allocation5], %s746
      %s749 = sshll.u32 [#allocation6], 4
      %s750 = int_to_ptr.vmem [resolvable:$true] %s749
      %752 = dma.vmem_to_hbm [thread:$0]  %s750, 16, %s3, [#allocation5]
    $region21: #{tpu_custom_call.1} parent=1 // pred_fallthru
      _
    // Predicated region
    $region22: #{tpu_custom_call.1} parent=1 // pred_check
      _
    $region23: #{tpu_custom_call.1} parent=1 // pred_check_branch
      %754 = sbr.rel (0) target = $region25
    $region24: #{tpu_custom_call.1} parent=1 // pred_region
      %755 = dma.done [#allocation5], 16
    $region25: #{tpu_custom_call.1} parent=1 // pred_fallthru
      _
    %756 = vsyncpa [#allocation4], 1
    %757 = vsyncpa [#allocation5], 1

</llo_original>
